<compile_context>
chip_gen: v5e
topology: v5e:2x2
jax: 0.10.0
libtpu: 0.0.40
codegen_flags: <defaults>
</compile_context>

<pallas_src>
import numpy as np

import jax
import jax.numpy as jnp
from jax.experimental import pallas as pl
from jax.experimental.pallas import tpu as pltpu

_LANES = 128


def _round_up(x, m):
    return -(-x // m) * m


def _clip_boxes_kernel(boxes_ref, lo_ref, hi_ref, out_ref):
    # boxes_ref: (tile, 128); lo/hi: (1, 128) per-lane clamp bounds
    # (sublane-broadcast).  Pure VPU work, hidden under the HBM stream.
    out_ref[...] = jnp.minimum(jnp.maximum(boxes_ref[...], lo_ref[...]),
                               hi_ref[...])


def clip_boxes_forward(boxes, img, *, tile_rows=4096):
    """boxes: (B, N, 4) float; img: (B, C, H, W). Returns clipped boxes."""
    B, N, c4 = boxes.shape
    assert c4 == 4, "boxes last dim must be 4 (x1, y1, x2, y2)"
    assert jnp.issubdtype(boxes.dtype, jnp.floating), (
        "integer box dtypes are not supported (±inf clamp sentinels)")
    height, width = img.shape[2], img.shape[3]          # static under jit

    total = B * N * 4
    rows = -(-total // _LANES)                          # ceil div

    # Per-lane clamp bounds.  Flattened row-major, the coordinate id of element
    # (r, lane) is (r*128 + lane) % 4 == lane % 4 because 128 % 4 == 0.
    pat_lo = np.array([0.0, 0.0, -np.inf, -np.inf], np.float32)
    pat_hi = np.array([np.inf, np.inf, float(width), float(height)], np.float32)
    lo = jnp.asarray(np.tile(pat_lo, _LANES // 4)[None, :], dtype=boxes.dtype)
    hi = jnp.asarray(np.tile(pat_hi, _LANES // 4)[None, :], dtype=boxes.dtype)

    # Lane-dense slab.  Pad only when total isn't 128-divisible (rare path).
    padded = rows * _LANES != total
    flat = boxes.reshape(-1)
    if padded:
        flat = jnp.pad(flat, (0, rows * _LANES - total))
    slab = flat.reshape(rows, _LANES)                   # bitcast, no copy

    # Tile selection: multiple of 8 sublanes; ragged last block masked by
    # Pallas.  Cap so large inputs produce >= 2 grid steps (v7x megacore).
    if rows < 8:
        tile = rows                                     # block == full extent
    else:
        tile = max(8, min(_round_up(int(tile_rows), 8), _round_up(rows, 8)))
        if rows >= 16:
            tile = min(tile, _round_up(-(-rows // 2), 8))
    grid = (pl.cdiv(rows, tile),)

    out = pl.pallas_call(
        _clip_boxes_kernel,
        out_shape=jax.ShapeDtypeStruct((rows, _LANES), boxes.dtype),
        grid=grid,
        in_specs=[
            pl.BlockSpec((tile, _LANES), lambda i: (i, 0)),
            pl.BlockSpec((1, _LANES), lambda i: (0, 0)),
            pl.BlockSpec((1, _LANES), lambda i: (0, 0)),
        ],
        out_specs=pl.BlockSpec((tile, _LANES), lambda i: (i, 0)),
        compiler_params=pltpu.CompilerParams(
            dimension_semantics=("parallel",)),
        cost_estimate=pl.CostEstimate(
            flops=2 * total,                            # one max + one min/elem
            transcendentals=0,
            bytes_accessed=2 * total * boxes.dtype.itemsize),
    )(slab, lo, hi)

    if padded:
        return out.reshape(-1)[:total].reshape(B, N, 4)
    return out.reshape(B, N, 4)


def reference_clip_boxes(boxes, img):
    """Pure-JAX reference matching the PyTorch module."""
    height, width = img.shape[2], img.shape[3]
    x1 = jnp.maximum(boxes[..., 0], 0.0)
    y1 = jnp.maximum(boxes[..., 1], 0.0)
    x2 = jnp.minimum(boxes[..., 2], float(width))
    y2 = jnp.minimum(boxes[..., 3], float(height))
    return jnp.stack([x1, y1, x2, y2], axis=-1)


if __name__ == "__main__":
    # Small shapes: batch=2, 512 boxes of 4 coords, image 2x3x16x16.
    B, N = 2, 512
    C, H, W = 3, 16, 16
    key = jax.random.PRNGKey(0)
    kb, ki = jax.random.split(key)
    # Box values spread well outside [0, W] x [0, H] so every clamp branch fires.
    boxes = jax.random.uniform(kb, (B, N, 4), jnp.float32,
                               minval=-10.0, maxval=float(W) + 10.0)
    img = jax.random.normal(ki, (B, C, H, W), jnp.float32)

    fwd = jax.jit(clip_boxes_forward, static_argnames="tile_rows")
    ref = reference_clip_boxes(boxes, img)

    # Exercise the default multi-step path (grid=(2,)) and a tiny-tile path.
    for tr in (4096, 8):
        out = jax.block_until_ready(fwd(boxes, img, tile_rows=tr))
        assert out.shape == boxes.shape
        assert jnp.array_equal(out, ref), (
            f"tile_rows={tr}: max abs err = {jnp.max(jnp.abs(out - ref))}")

    # Ragged case: 1*37*4 = 148 elements (not 128-divisible) -> pad/slice path,
    # rows < 8 -> full-extent block.
    boxes2 = jax.random.uniform(jax.random.PRNGKey(1), (1, 37, 4), jnp.float32,
                                minval=-10.0, maxval=30.0)
    img2 = jnp.zeros((1, 3, 20, 24), jnp.float32)
    out2 = jax.block_until_ready(fwd(boxes2, img2, tile_rows=4096))
    assert jnp.array_equal(out2, reference_clip_boxes(boxes2, img2))

    print("KERNEL_OK")
</pallas_src>

<mosaic_0001>
module attributes {stable_mosaic.version = 11 : i64} {
  func.func @_clip_boxes_kernel(%arg0: i32, %arg1: memref<16x128xf32, #tpu.memory_space<vmem>>, %arg2: memref<1x128xf32, #tpu.memory_space<vmem>>, %arg3: memref<1x128xf32, #tpu.memory_space<vmem>>, %arg4: memref<16x128xf32, #tpu.memory_space<vmem>>) attributes {dimension_semantics = [#tpu.dimension_semantics<parallel>], iteration_bounds = array<i64: 2>, scalar_prefetch = 0 : i64, scratch_operands = 0 : i64, tpu.core_type = #tpu.core_type<tc>, window_params = [{transform_indices = @transform_0, window_bounds = array<i64: 16, 128>}, {pipeline_mode = #tpu.pipeline_mode<synchronous>, transform_indices = @transform_1, window_bounds = array<i64: 1, 128>}, {pipeline_mode = #tpu.pipeline_mode<synchronous>, transform_indices = @transform_2, window_bounds = array<i64: 1, 128>}, {transform_indices = @transform_3, window_bounds = array<i64: 16, 128>}]} {
    %c0 = arith.constant 0 : index
    %c0_0 = arith.constant 0 : index
    %0 = vector.load %arg1[%c0, %c0_0] : memref<16x128xf32, #tpu.memory_space<vmem>>, vector<16x128xf32>
    %c0_1 = arith.constant 0 : index
    %c0_2 = arith.constant 0 : index
    %1 = vector.load %arg2[%c0_1, %c0_2] : memref<1x128xf32, #tpu.memory_space<vmem>>, vector<1x128xf32>
    %2 = vector.broadcast %1 : vector<1x128xf32> to vector<16x128xf32>
    %3 = arith.maximumf %0, %2 : vector<16x128xf32>
    %c0_3 = arith.constant 0 : index
    %c0_4 = arith.constant 0 : index
    %4 = vector.load %arg3[%c0_3, %c0_4] : memref<1x128xf32, #tpu.memory_space<vmem>>, vector<1x128xf32>
    %5 = vector.broadcast %4 : vector<1x128xf32> to vector<16x128xf32>
    %6 = arith.minimumf %3, %5 : vector<16x128xf32>
    %c0_5 = arith.constant 0 : index
    %c0_6 = arith.constant 0 : index
    %7 = vector.load %arg4[%c0_5, %c0_6] : memref<16x128xf32, #tpu.memory_space<vmem>>, vector<16x128xf32>
    tpu.vector_store %arg4[%c0_5, %c0_6], %6 {strides = array<i32>} : memref<16x128xf32, #tpu.memory_space<vmem>>, vector<16x128xf32>,
    return
  }
  func.func @transform_0(%arg0: i32) -> (i32, i32) {
    %c0_i32 = arith.constant 0 : i32
    %c0_i32_0 = arith.constant 0 : i32
    return %arg0, %c0_i32 : i32, i32
  }
  func.func @transform_1(%arg0: i32) -> (i32, i32) {
    %c0_i32 = arith.constant 0 : i32
    %c0_i32_0 = arith.constant 0 : i32
    %c0_i32_1 = arith.constant 0 : i32
    return %c0_i32, %c0_i32_0 : i32, i32
  }
  func.func @transform_2(%arg0: i32) -> (i32, i32) {
    %c0_i32 = arith.constant 0 : i32
    %c0_i32_0 = arith.constant 0 : i32
    %c0_i32_1 = arith.constant 0 : i32
    return %c0_i32, %c0_i32_0 : i32, i32
  }
  func.func @transform_3(%arg0: i32) -> (i32, i32) {
    %c0_i32 = arith.constant 0 : i32
    %c0_i32_0 = arith.constant 0 : i32
    return %arg0, %c0_i32 : i32, i32
  }
}

</mosaic_0001>

<llo_original>
// kernel: clip_boxes_forward.1
$region0: #{clip_boxes_forward.1}
  #allocation0 [shape = 'u32[]', space=smem, size = 0x4, offset = 0x4, fixed_abs, tag = 'smem constant byte address 0x4 - core index']
  #allocation1 [shape = 'u32[72,128]{1,0:T(1,128)}', space=vmem, size = 0x9000, scoped, tag = 'internal scratch']
  %s0 = inlined_call_operand.vmem [shape: f32[32,128], index: 0, kind: input, shape index: {}]
  %s1 = inlined_call_operand.vmem [shape: f32[1,128], index: 1, kind: input, shape index: {}]
  %s2 = inlined_call_operand.vmem [shape: f32[1,128], index: 2, kind: input, shape index: {}]
  %s3 = inlined_call_operand.vmem [shape: f32[32,128], index: 3, kind: output, shape index: {}]
  %s4 = sld [smem:[#allocation0]]
  $region45: #{clip_boxes_forward.1} parent=0
    _
  %s6 = ssub.s32 1, %s4
  %s7 = scalar_select 0, %s6, %s4
  loop: start=0, step=1, limit=4
  $region2: #{clip_boxes_forward.1} parent=0 // loop_pre_header
    _
  $region3: #{clip_boxes_forward.1} parent=0 // loop_header
    %s9 = sphi 0, %s13
    %p10 = scmp.ge.s32.totalorder %s9, 4
    %s19 = sphi 0, %s21
    %s22 = sphi 0, %s19
    %s23 = sphi 0, %s22
    %s39 = sphi 0, %s23
    %s43 = sphi 0, %s43
    %s45 = sphi 0, %s43
    %s46 = sphi 0, %s45
    %s60 = sphi 0, %s46
    %s64 = sphi 0, %s64
    %s66 = sphi 0, %s64
    %s67 = sphi 0, %s66
    %s81 = sphi 0, %s67
    %s87 = sphi 0, %s89
    %s90 = sphi 0, %s87
    %s91 = sphi 0, %s90
    %s107 = sphi 0, %s91
  $region4: #{clip_boxes_forward.1} parent=0 // loop_header_branch
    %12 = sbr.rel (%p10) target = $region8
  $region5: #{clip_boxes_forward.1} parent=0 // loop_body
    %s14 = ssub.s32 %s9, 1
    %s15 = ssub.s32 %s9, 2
    %s16 = sadd.s32 %s9, 1
    %s17 = ssub.s32 %s9, %s16
    %p18 = scmp.eq.s32.totalorder %s17, 0
    %s20 = sadd.s32 %s19, 1
    %s21 = scalar_select %p18, %s19, %s20
    %p24 = pneg %p18
    %p25 = scmp.eq.s32.totalorder %s9, 1
    %p26 = por %p24, %p25
    %p27 = scmp.ne.s32.totalorder %s19, %s22
    %p28 = scmp.eq.s32.totalorder %s9, 0
    %p29 = por %p27, %p28
    %p30 = scmp.ne.s32.totalorder %s19, %s22
    %p31 = scmp.eq.s32.totalorder %s14, 1
    %p32 = por %p30, %p31
    %p33 = scmp.ne.s32.totalorder %s22, %s23
    %p34 = scmp.eq.s32.totalorder %s14, 0
    %p35 = por %p33, %p34
    %p36 = scmp.ne.s32.totalorder %s22, %s23
    %p37 = scmp.eq.s32.totalorder %s15, 1
    %p38 = por %p36, %p37
    %p40 = scmp.ne.s32.totalorder %s23, %s39
    %p41 = scmp.eq.s32.totalorder %s15, 0
    %p42 = por %p40, %p41
    %s44 = sadd.s32 %s43, 1
    %p47 = scmp.eq.s32.totalorder %s9, 1
    %p48 = scmp.ne.s32.totalorder %s43, %s45
    %p49 = scmp.eq.s32.totalorder %s9, 0
    %p50 = por %p48, %p49
    %p51 = scmp.ne.s32.totalorder %s43, %s45
    %p52 = scmp.eq.s32.totalorder %s14, 1
    %p53 = por %p51, %p52
    %p54 = scmp.ne.s32.totalorder %s45, %s46
    %p55 = scmp.eq.s32.totalorder %s14, 0
    %p56 = por %p54, %p55
    %p57 = scmp.ne.s32.totalorder %s45, %s46
    %p58 = scmp.eq.s32.totalorder %s15, 1
    %p59 = por %p57, %p58
    %p61 = scmp.ne.s32.totalorder %s46, %s60
    %p62 = scmp.eq.s32.totalorder %s15, 0
    %p63 = por %p61, %p62
    %s65 = sadd.s32 %s64, 1
    %p68 = scmp.eq.s32.totalorder %s9, 1
    %p69 = scmp.ne.s32.totalorder %s64, %s66
    %p70 = scmp.eq.s32.totalorder %s9, 0
    %p71 = por %p69, %p70
    %p72 = scmp.ne.s32.totalorder %s64, %s66
    %p73 = scmp.eq.s32.totalorder %s14, 1
    %p74 = por %p72, %p73
    %p75 = scmp.ne.s32.totalorder %s66, %s67
    %p76 = scmp.eq.s32.totalorder %s14, 0
    %p77 = por %p75, %p76
    %p78 = scmp.ne.s32.totalorder %s66, %s67
    %p79 = scmp.eq.s32.totalorder %s15, 1
    %p80 = por %p78, %p79
    %p82 = scmp.ne.s32.totalorder %s67, %s81
    %p83 = scmp.eq.s32.totalorder %s15, 0
    %p84 = por %p82, %p83
    %s85 = ssub.s32 %s9, %s16
    %p86 = scmp.eq.s32.totalorder %s85, 0
    %s88 = sadd.s32 %s87, 1
    %s89 = scalar_select %p86, %s87, %s88
    %p92 = pneg %p86
    %p93 = scmp.eq.s32.totalorder %s9, 1
    %p94 = por %p92, %p93
    %p95 = scmp.ne.s32.totalorder %s87, %s90
    %p96 = scmp.eq.s32.totalorder %s9, 0
    %p97 = por %p95, %p96
    %p98 = scmp.ne.s32.totalorder %s87, %s90
    %p99 = scmp.eq.s32.totalorder %s14, 1
    %p100 = por %p98, %p99
    %p101 = scmp.ne.s32.totalorder %s90, %s91
    %p102 = scmp.eq.s32.totalorder %s14, 0
    %p103 = por %p101, %p102
    %p104 = scmp.ne.s32.totalorder %s90, %s91
    %p105 = scmp.eq.s32.totalorder %s15, 1
    %p106 = por %p104, %p105
    %p108 = scmp.ne.s32.totalorder %s91, %s107
    %p109 = scmp.eq.s32.totalorder %s15, 0
    %p110 = por %p108, %p109
    %p111 = scmp.le.s32.totalorder 1, %s9
    %p112 = scmp.lt.s32.totalorder %s9, 3
    %p113 = pnand %p111, %p112
    %p114 = pneg %p113
    // Predicated region
    $region9: #{clip_boxes_forward.1} parent=5 // pred_check
      _
    $region10: #{clip_boxes_forward.1} parent=5 // pred_check_branch
      %116 = sbr.rel (%p113) target = $region12
    $region11: #{clip_boxes_forward.1} parent=5 // pred_region
      %s117 = ssub.s32 %s9, 1
      // Predicated region
      $region13: #{clip_boxes_forward.1} parent=11 // pred_check
        %p118 = pneg %p56
      $region14: #{clip_boxes_forward.1} parent=11 // pred_check_branch
        %120 = sbr.rel (%p118) target = $region16
      $region15: #{clip_boxes_forward.1} parent=11 // pred_region
        _
      $region16: #{clip_boxes_forward.1} parent=11 // pred_fallthru
        _
      // Predicated region
      $region17: #{clip_boxes_forward.1} parent=11 // pred_check
        %p121 = pneg %p77
      $region18: #{clip_boxes_forward.1} parent=11 // pred_check_branch
        %123 = sbr.rel (%p121) target = $region20
      $region19: #{clip_boxes_forward.1} parent=11 // pred_region
        _
      $region20: #{clip_boxes_forward.1} parent=11 // pred_fallthru
        _
    $region12: #{clip_boxes_forward.1} parent=5 // pred_fallthru
      _
    %p124 = scmp.lt.s32.totalorder %s9, 2
    // Predicated region
    $region21: #{clip_boxes_forward.1} parent=5 // pred_check
      %p125 = pneg %p124
    $region22: #{clip_boxes_forward.1} parent=5 // pred_check_branch
      %127 = sbr.rel (%p125) target = $region24
    $region23: #{clip_boxes_forward.1} parent=5 // pred_region
      // Predicated region
      $region25: #{clip_boxes_forward.1} parent=23 // pred_check
        %p128 = pneg %p29
      $region26: #{clip_boxes_forward.1} parent=23 // pred_check_branch
        %130 = sbr.rel (%p128) target = $region28
      $region27: #{clip_boxes_forward.1} parent=23 // pred_region
        %s131 = smul.u32 2, %s9
        %p132 = scmp.lt.s32.totalorder %s131, 3
        %s133 = scalar_select %p132, %s131, 3
        %s134 = smul.addr %s133, 8
        %s135 = scalar_lea.vmem %s0, %s134
        %s136 = smul.u32 2, %s9
      $region28: #{clip_boxes_forward.1} parent=23 // pred_fallthru
        _
    $region24: #{clip_boxes_forward.1} parent=5 // pred_fallthru
      _
    %p137 = scmp.le.s32.totalorder 1, %s9
    %p138 = scmp.lt.s32.totalorder %s9, 3
    %p139 = pnand %p137, %p138
    %p140 = pneg %p139
    // Predicated region
    $region29: #{clip_boxes_forward.1} parent=5 // pred_check
      _
    $region30: #{clip_boxes_forward.1} parent=5 // pred_check_branch
      %142 = sbr.rel (%p139) target = $region32
    $region31: #{clip_boxes_forward.1} parent=5 // pred_region
      %s143 = ssub.s32 %s9, 1
      %s144 = smul.u32 2, %s14
      %p145 = scmp.lt.s32.totalorder %s144, 3
      %s146 = scalar_select %p145, %s144, 3
      %s147 = smul.addr %s146, 8
      %s148 = scalar_lea.vmem %s0, %s147
      %p149 = pneg %p35
      %p150 = pneg %p32
      %p151 = pneg %p56
      %p152 = pneg %p53
      %p153 = pneg %p77
      %p154 = pneg %p74
      %p155 = pneg %p103
      %p156 = pneg %p100
      %s157 = smul.u32 2, %s14
      %p158 = scmp.lt.s32.totalorder %s157, 3
      %s159 = scalar_select %p158, %s157, 3
      %s160 = smul.addr %s159, 8
      %s161 = scalar_lea.vmem %s3, %s160
      %s162 = smul.u32 2, %s14
      %p163 = scmp.lt.s32.totalorder %s162, 3
      %s164 = scalar_select %p163, %s162, 3
      %s165 = smul.addr %s164, 8
      %s166 = scalar_lea.vmem %s0, %s165
      %s167 = smul.u32 2, %s14
      %s168 = smul.u32 2, %s14
      %p169 = scmp.lt.s32.totalorder %s168, 3
      %s170 = scalar_select %p169, %s168, 3
      %s171 = smul.addr %s170, 8
      %s172 = scalar_lea.vmem %s3, %s171
      %s173 = smul.u32 2, %s14
      %v174 = vld [vmem:[%s166] sm:$0xff]
      %v175 = vld [vmem:[%s166 + $0x8] sm:$0xff]
      %v176 = vld [vmem:[%s1] sm:$0x1]
      %v178 = vperm.slane %v176, 0
      %v180 = vmax.f32 %v174, %v178
      %v181 = vmax.f32 %v175, %v178
      %v182 = vld [vmem:[%s2] sm:$0x1]
      %v184 = vperm.slane %v182, 0
      %v186 = vmin.f32 %v180, %v184
      %v187 = vmin.f32 %v181, %v184
      %188 = vst [vmem:[%s172] sm:$0xff] %v186
      %189 = vst [vmem:[%s172 + $0x8] sm:$0xff] %v187
      %s190 = smul.u32 2, %s14
      %p191 = scmp.lt.s32.totalorder %s190, 3
      %s192 = scalar_select %p191, %s190, 3
      %s193 = smul.addr %s192, 8
      %s194 = scalar_lea.vmem %s3, %s193
      // Predicated region
      $region33: #{clip_boxes_forward.1} parent=31 // pred_check
        %p195 = pneg %p100
      $region34: #{clip_boxes_forward.1} parent=31 // pred_check_branch
        %197 = sbr.rel (%p195) target = $region36
      $region35: #{clip_boxes_forward.1} parent=31 // pred_region
        %s198 = smul.u32 2, %s14
      $region36: #{clip_boxes_forward.1} parent=31 // pred_fallthru
        _
    $region32: #{clip_boxes_forward.1} parent=5 // pred_fallthru
      _
    %p199 = scmp.le.s32.totalorder 2, %s9
    // Predicated region
    $region37: #{clip_boxes_forward.1} parent=5 // pred_check
      %p200 = pneg %p199
    $region38: #{clip_boxes_forward.1} parent=5 // pred_check_branch
      %202 = sbr.rel (%p200) target = $region40
    $region39: #{clip_boxes_forward.1} parent=5 // pred_region
      %s203 = ssub.s32 %s9, 2
      // Predicated region
      $region41: #{clip_boxes_forward.1} parent=39 // pred_check
        %p204 = pneg %p106
      $region42: #{clip_boxes_forward.1} parent=39 // pred_check_branch
        %206 = sbr.rel (%p204) target = $region44
      $region43: #{clip_boxes_forward.1} parent=39 // pred_region
        %s207 = smul.u32 2, %s15
        %p208 = scmp.lt.s32.totalorder %s207, 3
        %s209 = scalar_select %p208, %s207, 3
        %s210 = smul.addr %s209, 8
        %s211 = scalar_lea.vmem %s3, %s210
      $region44: #{clip_boxes_forward.1} parent=39 // pred_fallthru
        _
    $region40: #{clip_boxes_forward.1} parent=5 // pred_fallthru
      _
  $region6: #{clip_boxes_forward.1} parent=0 // loop_footer
    %s13 = sadd.s32 1, %s9
  $region7: #{clip_boxes_forward.1} parent=0 // loop_footer_branch
    %8 = sbr.rel target = $region3
  $region8: #{clip_boxes_forward.1} parent=0 // loop_exit
    _

</llo_original>
